<compile_context>
chip_gen: v7x
topology: tpu7x:2x2x1
jax: 0.10.0
libtpu: 0.0.40
codegen_flags: <defaults>
</compile_context>

<pallas_src>
import functools

import jax
import jax.numpy as jnp
import numpy as np
from jax.experimental import pallas as pl
from jax.experimental.pallas import tpu as pltpu

KSIZE = 8
STRIDE = 8
PAD = 1

_RESIDENT_B_BUDGET = 18 << 20   # double-buffered bf16 weight budget (bytes)


def _round_up(x, m):
    return (x + m - 1) // m * m


def _plan(cin, cout):
    """Static tiling plan shared by pack_weight() and downsample_forward()."""
    k = cin * KSIZE * KSIZE
    kp = _round_up(k, 128)                      # only pads when cin is odd
    tk = 128
    for cand in (1024, 512, 256):
        if kp % cand == 0:
            tk = cand
            break
    np_ = _round_up(max(cout, 128), 128)        # lane-dense output (unmasked stores)
    resident = 2 * kp * np_ * 2 <= _RESIDENT_B_BUDGET
    tn = np_ if resident else (256 if np_ % 256 == 0 else 128)
    return k, kp, np_, tk, tn, resident


def _choose_tm(m):
    for cand in (512, 256, 128):
        if m % cand == 0:
            return cand
    if m <= 512:
        return _round_up(m, 8)   # single sublane-aligned row tile; no M->128 blowup
    return 256


# ---------------------------------------------------------------------------
# Pallas kernels (accumulate directly into the resident f32 output block).
# ---------------------------------------------------------------------------
def _make_resident_kernel(tk):
    def kernel(a_ref, b_ref, o_ref):
        # a: (TM, TK) bf16 tile; b: (Kp, Np) bf16 fully VMEM-resident (single
        # HBM fetch for the whole kernel); o: (TM, Np) f32, resident across k.
        k = pl.program_id(1)

        @pl.when(k == 0)
        def _():
            o_ref[...] = jnp.zeros_like(o_ref)

        off = pl.multiple_of(k * tk, tk)
        o_ref[...] += jnp.dot(a_ref[...], b_ref[pl.ds(off, tk), :],
                              preferred_element_type=jnp.float32)

    return kernel


def _streaming_kernel(a_ref, b_ref, o_ref):
    # a: (TM, TK) bf16, b: (TK, TN) bf16, o: (TM, TN) f32 (resident across k).
    @pl.when(pl.program_id(2) == 0)
    def _():
        o_ref[...] = jnp.zeros_like(o_ref)

    o_ref[...] += jnp.dot(a_ref[...], b_ref[...],
                          preferred_element_type=jnp.float32)


def _tiled_matmul(a, b, *, tm, tk, tn, resident, true_dims):
    """a: (Mp, Kp) bf16, b: (Kp, Np) bf16 -> (Mp, Np) f32."""
    mp, kp = a.shape
    kp2, np_ = b.shape
    assert kp == kp2
    m_true, k_true, n_true = true_dims

    if resident:
        grid = (mp // tm, kp // tk)
        kernel = _make_resident_kernel(tk)
        in_specs = [
            pl.BlockSpec((tm, tk), lambda i, k: (i, k)),
            # Full-array block, constant index -> the weight is DMA'd once.
            pl.BlockSpec((kp, np_), lambda i, k: (0, 0)),
        ]
        out_specs = pl.BlockSpec((tm, np_), lambda i, k: (i, 0))
        dims = ("parallel", "arbitrary")
        vmem_need = 2 * tm * tk * 2 + 2 * kp * np_ * 2 + 2 * tm * np_ * 4
    else:
        grid = (mp // tm, np_ // tn, kp // tk)
        kernel = _streaming_kernel
        in_specs = [
            pl.BlockSpec((tm, tk), lambda i, j, k: (i, k)),
            pl.BlockSpec((tk, tn), lambda i, j, k: (k, j)),
        ]
        out_specs = pl.BlockSpec((tm, tn), lambda i, j, k: (i, j))
        dims = ("parallel", "parallel", "arbitrary")
        vmem_need = 2 * tm * tk * 2 + 2 * tk * tn * 2 + 2 * tm * tn * 4

    # Raise the scoped-VMEM cap only when the working set needs it (v5e's
    # default is 16 MiB); cap at 64 MiB so v7x (64 MiB physical) stays safe.
    vmem_limit = None
    if vmem_need > (12 << 20):
        vmem_limit = int(min(64 << 20, max(32 << 20, vmem_need + (4 << 20))))

    return pl.pallas_call(
        kernel,
        out_shape=jax.ShapeDtypeStruct((mp, np_), jnp.float32),
        grid_spec=pltpu.PrefetchScalarGridSpec(
            num_scalar_prefetch=0,
            grid=grid,
            in_specs=in_specs,
            out_specs=out_specs,
        ),
        compiler_params=pltpu.CompilerParams(
            dimension_semantics=dims,
            vmem_limit_bytes=vmem_limit,
        ),
        cost_estimate=pl.CostEstimate(
            flops=2 * m_true * k_true * n_true,
            transcendentals=0,
            bytes_accessed=m_true * k_true * 2 + k_true * n_true * 2
            + m_true * n_true * 4,
        ),
    )(a, b)


# ---------------------------------------------------------------------------
# Weight repack: done ONCE, reused across forward calls.
# (Cout, Cin, 8, 8) f32 -> (Kp, Np) bf16 with K ordered (kh, kw, cin).
# ---------------------------------------------------------------------------
def pack_weight(weight):
    cout, cin, kh, kw = weight.shape
    assert (kh, kw) == (KSIZE, KSIZE)
    k, kp, np_, _, _, _ = _plan(cin, cout)
    w = jnp.transpose(weight, (2, 3, 1, 0)).reshape(k, cout).astype(jnp.bfloat16)
    if (kp, np_) != (k, cout):
        w = jnp.pad(w, ((0, kp - k), (0, np_ - cout)))
    return w


# ---------------------------------------------------------------------------
# Forward: fused single-pass NHWC im2col in XLA, contraction in Pallas.
# ---------------------------------------------------------------------------
@functools.partial(jax.jit, static_argnames=("nhwc_out",))
def downsample_forward(x_nchw, w_packed, nhwc_out=False):
    n, c, h, w = x_nchw.shape
    cout = c                                   # n_feat -> n_feat
    ho = (h + 2 * PAD - KSIZE) // STRIDE + 1
    wo = (w + 2 * PAD - KSIZE) // STRIDE + 1
    k, kp, np_, tk, tn, resident = _plan(c, cout)
    assert w_packed.shape == (kp, np_), "weight was packed for a different n_feat"

    # Cast once, relayout to NHWC so im2col moves contiguous runs of C and the
    # A matrix is lane-dense on channels; stride == ksize makes the window
    # extraction a pure pad + crop + reshape + transpose (one fused pass).
    xb = jnp.transpose(x_nchw.astype(jnp.bfloat16), (0, 2, 3, 1))       # NHWC
    xb = jnp.pad(xb, ((0, 0), (PAD, PAD), (PAD, PAD), (0, 0)))
    xb = xb[:, :ho * KSIZE, :wo * KSIZE, :]
    patches = xb.reshape(n, ho, KSIZE, wo, KSIZE, c).transpose(0, 1, 3, 2, 4, 5)

    m = n * ho * wo
    a = patches.reshape(m, k)                  # K ordered (kh, kw, c)

    tm = _choose_tm(m)
    mp = _round_up(m, tm)
    if (mp, kp) != (m, k):                     # skip the extra HBM copy when aligned
        a = jnp.pad(a, ((0, mp - m), (0, kp - k)))

    out = _tiled_matmul(a, w_packed, tm=tm, tk=tk, tn=tn, resident=resident,
                        true_dims=(m, k, cout))
    out = out[:m, :cout].reshape(n, ho, wo, cout)     # lane-dense NHWC result
    if nhwc_out:
        return out                              # preferred layout for downstream fusion
    return jnp.transpose(out, (0, 3, 1, 2))     # match the PyTorch module (NCHW)


# ---------------------------------------------------------------------------
# Main
# ---------------------------------------------------------------------------
if __name__ == "__main__":
    key = jax.random.PRNGKey(0)
    k_x, k_w = jax.random.split(key)

    N, C, H, W = 2, 4, 16, 16          # n_feat = 4
    x = jax.random.normal(k_x, (N, C, H, W), dtype=jnp.float32)
    weight = jax.random.normal(k_w, (C, C, KSIZE, KSIZE), dtype=jnp.float32) * 0.05

    w_packed = pack_weight(weight)     # hoisted weight repack (once per module)

    y = downsample_forward(x, w_packed)
    y = jax.block_until_ready(y)
    assert y.shape == (N, C, 2, 2)

    # Reference: XLA conv with identical bf16 operand quantization, f32 accumulate.
    xq = x.astype(jnp.bfloat16).astype(jnp.float32)
    wq = weight.astype(jnp.bfloat16).astype(jnp.float32)
    y_ref = jax.lax.conv_general_dilated(
        xq, wq,
        window_strides=(STRIDE, STRIDE),
        padding=[(PAD, PAD), (PAD, PAD)],
        dimension_numbers=("NCHW", "OIHW", "NCHW"),
        precision=jax.lax.Precision.HIGHEST,
    )
    np.testing.assert_allclose(np.asarray(y), np.asarray(y_ref), rtol=1e-2, atol=1e-2)

    print("KERNEL_OK")
</pallas_src>

<mosaic_0001>
module attributes {stable_mosaic.version = 11 : i64} {
  func.func @kernel(%arg0: i32, %arg1: i32, %arg2: memref<8x256xbf16, #tpu.memory_space<vmem>>, %arg3: memref<256x128xbf16, #tpu.memory_space<vmem>>, %arg4: memref<8x128xf32, #tpu.memory_space<vmem>>) attributes {dimension_semantics = [#tpu.dimension_semantics<parallel>, #tpu.dimension_semantics<arbitrary>], iteration_bounds = array<i64: 1, 1>, scalar_prefetch = 0 : i64, scratch_operands = 0 : i64, tpu.core_type = #tpu.core_type<tc>, window_params = [{transform_indices = @transform_0, window_bounds = array<i64: 8, 256>}, {pipeline_mode = #tpu.pipeline_mode<synchronous>, transform_indices = @transform_1, window_bounds = array<i64: 256, 128>}, {transform_indices = @transform_2, window_bounds = array<i64: 8, 128>}]} {
    %c0_i32 = arith.constant 0 : i32
    %0 = arith.cmpi eq, %arg1, %c0_i32 : i32
    %1 = arith.extui %0 : i1 to i32
    %c0_i32_0 = arith.constant 0 : i32
    %2 = arith.cmpi ne, %1, %c0_i32_0 : i32
    scf.if %2 {
      %cst_7 = arith.constant 0.000000e+00 : f32
      %12 = vector.broadcast %cst_7 : f32 to vector<8x128xf32>
      %c0_8 = arith.constant 0 : index
      %c0_9 = arith.constant 0 : index
      %13 = vector.load %arg4[%c0_8, %c0_9] : memref<8x128xf32, #tpu.memory_space<vmem>>, vector<8x128xf32>
      tpu.vector_store %arg4[%c0_8, %c0_9], %12 {strides = array<i32>} : memref<8x128xf32, #tpu.memory_space<vmem>>, vector<8x128xf32>,
    } else {
    }
    %c256_i32 = arith.constant 256 : i32
    %3 = arith.muli %arg1, %c256_i32 : i32
    %4 = tpu.assume_multiple %3, 256 : i32
    %c0 = arith.constant 0 : index
    %c0_1 = arith.constant 0 : index
    %5 = vector.load %arg4[%c0, %c0_1] : memref<8x128xf32, #tpu.memory_space<vmem>>, vector<8x128xf32>
    %c0_2 = arith.constant 0 : index
    %c0_3 = arith.constant 0 : index
    %6 = vector.load %arg2[%c0_2, %c0_3] : memref<8x256xbf16, #tpu.memory_space<vmem>>, vector<8x256xbf16>
    %7 = arith.index_cast %4 : i32 to index
    %c0_4 = arith.constant 0 : index
    %8 = vector.load %arg3[%7, %c0_4] : memref<256x128xbf16, #tpu.memory_space<vmem>>, vector<256x128xbf16>
    %cst = arith.constant dense<0.000000e+00> : vector<8x128xf32>
    %9 = tpu.matmul %6, %8, %cst {dimension_numbers = #tpu.dot_dimension_numbers<[1], [0], [0], [1], [0, 0, 1, 1], [], []>} : vector<8x256xbf16>, vector<256x128xbf16>, vector<8x128xf32> -> vector<8x128xf32>
    %10 = arith.addf %5, %9 : vector<8x128xf32>
    %c0_5 = arith.constant 0 : index
    %c0_6 = arith.constant 0 : index
    %11 = vector.load %arg4[%c0_5, %c0_6] : memref<8x128xf32, #tpu.memory_space<vmem>>, vector<8x128xf32>
    tpu.vector_store %arg4[%c0_5, %c0_6], %10 {strides = array<i32>} : memref<8x128xf32, #tpu.memory_space<vmem>>, vector<8x128xf32>,
    return
  }
  func.func @transform_0(%arg0: i32, %arg1: i32) -> (i32, i32) {
    %c0_i32 = arith.constant 0 : i32
    return %arg0, %arg1 : i32, i32
  }
  func.func @transform_1(%arg0: i32, %arg1: i32) -> (i32, i32) {
    %c0_i32 = arith.constant 0 : i32
    %c0_i32_0 = arith.constant 0 : i32
    %c0_i32_1 = arith.constant 0 : i32
    return %c0_i32, %c0_i32_0 : i32, i32
  }
  func.func @transform_2(%arg0: i32, %arg1: i32) -> (i32, i32) {
    %c0_i32 = arith.constant 0 : i32
    %c0_i32_0 = arith.constant 0 : i32
    return %arg0, %c0_i32 : i32, i32
  }
}

</mosaic_0001>

<llo_original>
// kernel: downsample_forward.1
$region0: #{downsample_forward.1}
  #allocation0 [shape = 'u32[]', space=smem, size = 0x4, offset = 0x4, fixed_abs, tag = 'smem constant byte address 0x4 - core index']
  #allocation1 [shape = 'u32[144,128]{1,0:T(1,128)}', space=vmem, size = 0x12000, scoped, tag = 'internal scratch']
  %s0 = inlined_call_operand.vmem [shape: bf16[8,256], index: 0, kind: input, shape index: {}]
  %s1 = inlined_call_operand.vmem [shape: bf16[256,128], index: 1, kind: input, shape index: {}]
  %s2 = inlined_call_operand.hbm [shape: f32[8,128], index: 2, kind: output, shape index: {}]
  %s3 = sld [smem:[#allocation0]]
  $region22: #{downsample_forward.1} parent=0
    _
  %s5 = ssub.s32 1, %s3
  %s6 = scalar_select 0, %s5, %s3
  $region1: #{downsample_forward.1} parent=0
    #allocation2 [shape = 'u8[4096]{0}', space=vmem, size = 0x1000, scoped, tag = 'output window, operand 0, single buffered']
    #allocation3 [shape = 's32[1]{0}', space=sflag, size = 0x4, scoped, tag = 'scoped memory for downsample_forward.1']
    %7 = vsyncpa [#allocation3], 0
    // Predicated region
    $region2: #{downsample_forward.1} parent=1 // pred_check
      _
    $region3: #{downsample_forward.1} parent=1 // pred_check_branch
      %9 = sbr.rel (0) target = $region5
    $region4: #{downsample_forward.1} parent=1 // pred_region
      _
    $region5: #{downsample_forward.1} parent=1 // pred_fallthru
      _
    // Predicated region
    $region6: #{downsample_forward.1} parent=1 // pred_check
      _
    $region7: #{downsample_forward.1} parent=1 // pred_check_branch
      %11 = sbr.rel (0) target = $region9
    $region8: #{downsample_forward.1} parent=1 // pred_region
      _
    $region9: #{downsample_forward.1} parent=1 // pred_fallthru
      _
    %p13 = scmp.eq.s32.totalorder 0, 0
    // Predicated region
    $region10: #{downsample_forward.1} parent=1 // pred_check
      %p14 = pneg %p13
    $region11: #{downsample_forward.1} parent=1 // pred_check_branch
      %16 = sbr.rel (%p14) target = $region13
    $region12: #{downsample_forward.1} parent=1 // pred_region
      %17 = vst [vmem:[#allocation2] sm:$0xff] 0.0
    $region13: #{downsample_forward.1} parent=1 // pred_fallthru
      _
    %s18 = smul.u32 0, 256
    %v19 = vld [vmem:[#allocation2] sm:$0xff]
    %v20 = vld [vmem:[%s0] sm:$0xff]
    %s21 = sshra.s32 %s18, 3
    %s22 = sand.u32 %s18, 7
    %s23 = smul.addr %s21, 4
    %s24 = scalar_lea.vmem %s1, %s23
    %v25 = vld [vmem:[%s24] sm:$0xf]
    %v26 = vld [vmem:[%s24 + $0x4] sm:$0xf]
    %v27 = vld [vmem:[%s24 + $0x8] sm:$0xf]
    %v28 = vld [vmem:[%s24 + $0xc] sm:$0xf]
    %v29 = vld [vmem:[%s24 + $0x10] sm:$0xf]
    %v30 = vld [vmem:[%s24 + $0x14] sm:$0xf]
    %v31 = vld [vmem:[%s24 + $0x18] sm:$0xf]
    %v32 = vld [vmem:[%s24 + $0x1c] sm:$0xf]
    %v33 = vld [vmem:[%s24 + $0x20] sm:$0xf]
    %v34 = vld [vmem:[%s24 + $0x24] sm:$0xf]
    %v35 = vld [vmem:[%s24 + $0x28] sm:$0xf]
    %v36 = vld [vmem:[%s24 + $0x2c] sm:$0xf]
    %v37 = vld [vmem:[%s24 + $0x30] sm:$0xf]
    %v38 = vld [vmem:[%s24 + $0x34] sm:$0xf]
    %v39 = vld [vmem:[%s24 + $0x38] sm:$0xf]
    %v40 = vld [vmem:[%s24 + $0x3c] sm:$0xf]
    %v41 = vld [vmem:[%s24 + $0x40] sm:$0xf]
    %v42 = vld [vmem:[%s24 + $0x44] sm:$0xf]
    %v43 = vld [vmem:[%s24 + $0x48] sm:$0xf]
    %v44 = vld [vmem:[%s24 + $0x4c] sm:$0xf]
    %v45 = vld [vmem:[%s24 + $0x50] sm:$0xf]
    %v46 = vld [vmem:[%s24 + $0x54] sm:$0xf]
    %v47 = vld [vmem:[%s24 + $0x58] sm:$0xf]
    %v48 = vld [vmem:[%s24 + $0x5c] sm:$0xf]
    %v49 = vld [vmem:[%s24 + $0x60] sm:$0xf]
    %v50 = vld [vmem:[%s24 + $0x64] sm:$0xf]
    %v51 = vld [vmem:[%s24 + $0x68] sm:$0xf]
    %v52 = vld [vmem:[%s24 + $0x6c] sm:$0xf]
    %v53 = vld [vmem:[%s24 + $0x70] sm:$0xf]
    %v54 = vld [vmem:[%s24 + $0x74] sm:$0xf]
    %v55 = vld [vmem:[%s24 + $0x78] sm:$0xf]
    %v56 = vld [vmem:[%s24 + $0x7c] sm:$0xf]
    %v58 = vunpack.c.l.b16 %v20
    %v59 = vunpack.c.h.b16 %v20
    %v60 = vpack.c.b16 %v58, %v58
    %v61 = vpack.c.b16 %v59, %v59
    %v96 = vunpack.c.l.b16 %v25
    %v97 = vunpack.c.l.b16 %v26
    %v98 = vunpack.c.l.b16 %v27
    %v99 = vunpack.c.l.b16 %v28
    %v100 = vunpack.c.l.b16 %v29
    %v101 = vunpack.c.l.b16 %v30
    %v102 = vunpack.c.l.b16 %v31
    %v103 = vunpack.c.l.b16 %v32
    %v104 = vunpack.c.l.b16 %v33
    %v105 = vunpack.c.l.b16 %v34
    %v106 = vunpack.c.l.b16 %v35
    %v107 = vunpack.c.l.b16 %v36
    %v108 = vunpack.c.l.b16 %v37
    %v109 = vunpack.c.l.b16 %v38
    %v110 = vunpack.c.l.b16 %v39
    %v111 = vunpack.c.l.b16 %v40
    %v112 = vunpack.c.l.b16 %v41
    %v113 = vunpack.c.l.b16 %v42
    %v114 = vunpack.c.l.b16 %v43
    %v115 = vunpack.c.l.b16 %v44
    %v116 = vunpack.c.l.b16 %v45
    %v117 = vunpack.c.l.b16 %v46
    %v118 = vunpack.c.l.b16 %v47
    %v119 = vunpack.c.l.b16 %v48
    %v120 = vunpack.c.l.b16 %v49
    %v121 = vunpack.c.l.b16 %v50
    %v122 = vunpack.c.l.b16 %v51
    %v123 = vunpack.c.l.b16 %v52
    %v124 = vunpack.c.l.b16 %v53
    %v125 = vunpack.c.l.b16 %v54
    %v126 = vunpack.c.l.b16 %v55
    %v127 = vunpack.c.l.b16 %v56
    %v128 = vpack.c.b16 %v97, %v96
    %v129 = vpack.c.b16 %v99, %v98
    %v130 = vpack.c.b16 %v101, %v100
    %v131 = vpack.c.b16 %v103, %v102
    %v132 = vpack.c.b16 %v105, %v104
    %v133 = vpack.c.b16 %v107, %v106
    %v134 = vpack.c.b16 %v109, %v108
    %v135 = vpack.c.b16 %v111, %v110
    %v136 = vpack.c.b16 %v113, %v112
    %v137 = vpack.c.b16 %v115, %v114
    %v138 = vpack.c.b16 %v117, %v116
    %v139 = vpack.c.b16 %v119, %v118
    %v140 = vpack.c.b16 %v121, %v120
    %v141 = vpack.c.b16 %v123, %v122
    %v142 = vpack.c.b16 %v125, %v124
    %v143 = vpack.c.b16 %v127, %v126
    %160 = vmatprep.subr.bf16.mxu0 0
    %161 = vmatpush1.bf16.msra.mxu0 %v128
    %162 = vmatprep.subr.bf16.mxu0 0
    %163 = vmatpush1.bf16.msra.mxu0 %v129
    %164 = vmatprep.subr.bf16.mxu0 0
    %165 = vmatpush1.bf16.msra.mxu0 %v130
    %166 = vmatprep.subr.bf16.mxu0 0
    %167 = vmatpush1.bf16.msra.mxu0 %v131
    %168 = vmatprep.subr.bf16.mxu0 0
    %169 = vmatpush1.bf16.msra.mxu0 %v132
    %170 = vmatprep.subr.bf16.mxu0 0
    %171 = vmatpush1.bf16.msra.mxu0 %v133
    %172 = vmatprep.subr.bf16.mxu0 0
    %173 = vmatpush1.bf16.msra.mxu0 %v134
    %174 = vmatprep.subr.bf16.mxu0 0
    %175 = vmatpush1.bf16.msra.mxu0 %v135
    %176 = vmatprep.subr.bf16.mxu0 0
    %177 = vmatpush1.bf16.msra.mxu0 %v136
    %178 = vmatprep.subr.bf16.mxu0 0
    %179 = vmatpush1.bf16.msra.mxu0 %v137
    %180 = vmatprep.subr.bf16.mxu0 0
    %181 = vmatpush1.bf16.msra.mxu0 %v138
    %182 = vmatprep.subr.bf16.mxu0 0
    %183 = vmatpush1.bf16.msra.mxu0 %v139
    %184 = vmatprep.subr.bf16.mxu0 0
    %185 = vmatpush1.bf16.msra.mxu0 %v140
    %186 = vmatprep.subr.bf16.mxu0 0
    %187 = vmatpush1.bf16.msra.mxu0 %v141
    %188 = vmatprep.subr.bf16.mxu0 0
    %189 = vmatpush1.bf16.msra.mxu0 %v142
    %190 = vmatprep.subr.bf16.mxu0 0
    %191 = vmatpush1.bf16.msra.mxu0 %v143
    %192 = vmatprep.mubr.bf16.mxu0 %v61
    %193 = vmatmul.mubr.bf16.gmra.mrb[0].mxu0 %v60
    %v194 = vpop.f32.mrb[0].mxu0
    %v195 = vadd.f32 0.0, %v194
    %v196 = vpop.f32.mrb[0].mxu0
    %v197 = vpop.f32.mrb[0].mxu0
    %v198 = vpop.f32.mrb[0].mxu0
    %199 = vdwg.mxu0
    %v200 = vadd.f32 %v19, %v195
    %201 = vst [vmem:[#allocation2] sm:$0xff] %v200
    // Predicated region
    $region14: #{downsample_forward.1} parent=1 // pred_check
      _
    $region15: #{downsample_forward.1} parent=1 // pred_check_branch
      %203 = sbr.rel (0) target = $region17
    $region16: #{downsample_forward.1} parent=1 // pred_region
      %s205 = ssub.s32 128, 128
      %206 = vsyncadd [#allocation3], %s205
      %s208 = sshll.u32 [#allocation2], 4
      %s209 = int_to_ptr.vmem [resolvable:$true] %s208
      %211 = dma.vmem_to_hbm [thread:$0]  %s209, 128, %s2, [#allocation3]
    $region17: #{downsample_forward.1} parent=1 // pred_fallthru
      _
    // Predicated region
    $region18: #{downsample_forward.1} parent=1 // pred_check
      _
    $region19: #{downsample_forward.1} parent=1 // pred_check_branch
      %213 = sbr.rel (0) target = $region21
    $region20: #{downsample_forward.1} parent=1 // pred_region
      %214 = dma.done [#allocation3], 128
    $region21: #{downsample_forward.1} parent=1 // pred_fallthru
      _
    %215 = vsyncpa [#allocation3], 1

</llo_original>
